<compile_context>
chip_gen: v7x
topology: tpu7x:2x2x1
jax: 0.10.0
libtpu: 0.0.40
codegen_flags: <defaults>
</compile_context>

<pallas_src>
import jax
import jax.numpy as jnp
from jax import lax
from jax.experimental import pallas as pl

# ------------------------- config (small synthetic shapes) -------------------
B, S, D, H, F = 2, 8, 32, 2, 64        # batch, seq, hidden, heads, ffn
DH = D // H
T = B * S                              # flattened token count
VOCAB = 100
VOCAB_PAD = 128                        # pad vocab to one full 128-lane tile
MAX_POS = 16
GOAL_NUM, TOPIC_NUM = 5, 7             # Retriever head shapes (unused in forward)
EPS = 1e-12

# ---------------------- parameter-slab layout (128 x 128 f32) ----------------
#   lanes   0.. 31 : rows   0..127  tok_emb (VOCAB_PAD, D), zero-padded rows
#   lanes  32.. 63 : rows   0.. 31  wq  (D, D)   [pre-scaled by 1/sqrt(DH)]
#                    rows  32.. 63  wo  (D, D)
#                    rows  64..127  w2  (F, D)
#   lanes  64..127 : rows   0.. 31  wkv (D, 2D)  [wk | wv]
#                    rows  32.. 63  w1  (D, F)
#                    rows  64.. 79  pos_cat (T, D)        (lanes 64..95)
#                    rows  80.. 90  vector stack, 1 row per bias/LN vector
SLAB_ROWS, SLAB_LANES = 128, 128
LANE_TOK, LANE_A, LANE_B = 0, 32, 64
ROW_WQ, ROW_WO, ROW_W2 = 0, 32, 64     # at LANE_A
ROW_WKV, ROW_W1, ROW_POS, ROW_VEC = 0, 32, 64, 80   # at LANE_B
VEC_NAMES = ["emb_ln_g", "emb_ln_b", "bq", "bkv", "bo",
             "ln1_g", "ln1_b", "b1", "b2", "ln2_g", "ln2_b"]
VEC_IDX = {name: i for i, name in enumerate(VEC_NAMES)}


def _layernorm(x, gamma, beta):
    # Two independent lane reductions (E[x], E[x^2]) so they can overlap on the
    # XLU; var = E[x^2] - mean^2 (fine in f32 at these magnitudes).
    mu = jnp.mean(x, axis=-1, keepdims=True)
    ms = jnp.mean(x * x, axis=-1, keepdims=True)
    var = ms - mu * mu
    return (x - mu) * lax.rsqrt(var + EPS) * gamma + beta


def _vec(p_ref, name, width):
    """(1, width) view of one bias/LN row in the parameter slab."""
    r = ROW_VEC + VEC_IDX[name]
    return p_ref[r:r + 1, LANE_B:LANE_B + width]


# ------------------------------- Pallas kernel --------------------------------
def retriever_kernel(ids_ref, neg_ref, p_ref, o_ref):
    # ---- embedding: one-hot gather on the MXU + positional + embedding LN ----
    ids = ids_ref[...]                                           # (T, 1) int32
    vocab_iota = lax.broadcasted_iota(jnp.int32, (T, VOCAB_PAD), 1)
    one_hot = (ids == vocab_iota).astype(jnp.float32)            # (T, 128)
    tok_emb = p_ref[0:VOCAB_PAD, LANE_TOK:LANE_TOK + D]          # (128, D)
    pos = p_ref[ROW_POS:ROW_POS + T, LANE_B:LANE_B + D]          # (T, D)
    emb = jnp.dot(one_hot, tok_emb, preferred_element_type=jnp.float32) + pos
    x = _layernorm(emb, _vec(p_ref, "emb_ln_g", D), _vec(p_ref, "emb_ln_b", D))

    # ---- CLS rows (positions 0, S, ...) via static row slices (no MXU pick) --
    x_cls = jnp.concatenate([x[b * S:b * S + 1, :] for b in range(B)], axis=0)  # (B, D)

    neg = neg_ref[...]                                           # (B, T) additive mask

    # ---- attention: Q for CLS only (scale pre-folded), fused K|V matmul ------
    q = jnp.dot(x_cls, p_ref[ROW_WQ:ROW_WQ + D, LANE_A:LANE_A + D],
                preferred_element_type=jnp.float32) + _vec(p_ref, "bq", D)       # (B, D)
    kv = jnp.dot(x, p_ref[ROW_WKV:ROW_WKV + D, LANE_B:LANE_B + 2 * D],
                 preferred_element_type=jnp.float32) + _vec(p_ref, "bkv", 2 * D)  # (T, 2D)
    k = kv[:, :D]
    v = kv[:, D:]

    ctx_heads = []
    for h in range(H):                                           # static, H=2
        lo, hi = h * DH, (h + 1) * DH
        # (B, DH) . (T, DH)^T -> (B, T); cross-batch / padded keys killed by `neg`.
        scores = lax.dot_general(q[:, lo:hi], k[:, lo:hi],
                                 (((1,), (1,)), ((), ())),
                                 preferred_element_type=jnp.float32) + neg
        scores = scores - jnp.max(scores, axis=-1, keepdims=True)
        e = jnp.exp(scores)
        probs = e * pl.reciprocal(jnp.sum(e, axis=-1, keepdims=True), approx=True)
        ctx_heads.append(jnp.dot(probs, v[:, lo:hi],
                                 preferred_element_type=jnp.float32))            # (B, DH)
    ctx = jnp.concatenate(ctx_heads, axis=-1)                    # (B, D) lane concat

    attn = jnp.dot(ctx, p_ref[ROW_WO:ROW_WO + D, LANE_A:LANE_A + D],
                   preferred_element_type=jnp.float32) + _vec(p_ref, "bo", D)     # (B, D)

    # ---- post-LN residual block + FFN, CLS rows only --------------------------
    h1 = _layernorm(x_cls + attn, _vec(p_ref, "ln1_g", D), _vec(p_ref, "ln1_b", D))
    ffn = jnp.dot(h1, p_ref[ROW_W1:ROW_W1 + D, LANE_B:LANE_B + F],
                  preferred_element_type=jnp.float32) + _vec(p_ref, "b1", F)      # (B, F)
    # TODO(synk): HF BERT uses exact erf-GELU; tanh approximation kept (EUP path).
    ffn = jax.nn.gelu(ffn, approximate=True)
    ffn = jnp.dot(ffn, p_ref[ROW_W2:ROW_W2 + F, LANE_A:LANE_A + D],
                  preferred_element_type=jnp.float32) + _vec(p_ref, "b2", D)      # (B, D)

    o_ref[...] = _layernorm(h1 + ffn, _vec(p_ref, "ln2_g", D), _vec(p_ref, "ln2_b", D))


# ------------------------------ parameter setup -------------------------------
def init_params(key):
    ks = jax.random.split(key, 20)
    n = lambda k, shp, s: jax.random.normal(k, shp, jnp.float32) * s
    return {
        # synthetic query_bert (embedding + 1 encoder layer)
        "tok_emb": n(ks[0], (VOCAB, D), 0.02),
        "pos_emb": n(ks[1], (MAX_POS, D), 0.02),
        "emb_ln_g": jnp.ones((D,), jnp.float32),
        "emb_ln_b": jnp.zeros((D,), jnp.float32),
        "wq": n(ks[2], (D, D), 0.02), "bq": jnp.zeros((D,), jnp.float32),
        "wk": n(ks[3], (D, D), 0.02), "bk": jnp.zeros((D,), jnp.float32),
        "wv": n(ks[4], (D, D), 0.02), "bv": jnp.zeros((D,), jnp.float32),
        "wo": n(ks[5], (D, D), 0.02), "bo": jnp.zeros((D,), jnp.float32),
        "ln1_g": jnp.ones((D,), jnp.float32), "ln1_b": jnp.zeros((D,), jnp.float32),
        "w1": n(ks[6], (D, F), 0.02), "b1": jnp.zeros((F,), jnp.float32),
        "w2": n(ks[7], (F, D), 0.02), "b2": jnp.zeros((D,), jnp.float32),
        "ln2_g": jnp.ones((D,), jnp.float32), "ln2_b": jnp.zeros((D,), jnp.float32),
        # Retriever-owned parameters from __init__ (not used by forward()):
        "goal_proj_w1": n(ks[8], (D, D // 2), 0.02),
        "goal_proj_w2": n(ks[9], (D // 2, GOAL_NUM), 0.02),
        "topic_proj_w1": n(ks[10], (D, D // 2), 0.02),
        "topic_proj_w2": n(ks[11], (D // 2, TOPIC_NUM), 0.02),
        "linear_proj_w": n(ks[12], (D, 1), 0.02),
        "goal_embedding": n(ks[13], (GOAL_NUM, D), D ** (-0.5)),
    }


def prepare_kernel_params(p):
    """Host-side, one-time packing of all encoder weights into ONE (128,128) slab."""
    scale = 1.0 / (DH ** 0.5)
    tok_pad = jnp.zeros((VOCAB_PAD, D), jnp.float32).at[:VOCAB].set(p["tok_emb"])
    pos_cat = jnp.tile(p["pos_emb"][:S], (B, 1))                 # (T, D), pos ids repeat per batch
    wq_s = p["wq"] * scale                                       # fold 1/sqrt(DH) into Q
    bq_s = p["bq"] * scale
    wkv = jnp.concatenate([p["wk"], p["wv"]], axis=1)            # (D, 2D)
    bkv = jnp.concatenate([p["bk"], p["bv"]], axis=0)            # (2D,)

    slab = jnp.zeros((SLAB_ROWS, SLAB_LANES), jnp.float32)
    slab = slab.at[0:VOCAB_PAD, LANE_TOK:LANE_TOK + D].set(tok_pad)
    slab = slab.at[ROW_WQ:ROW_WQ + D, LANE_A:LANE_A + D].set(wq_s)
    slab = slab.at[ROW_WO:ROW_WO + D, LANE_A:LANE_A + D].set(p["wo"])
    slab = slab.at[ROW_W2:ROW_W2 + F, LANE_A:LANE_A + D].set(p["w2"])
    slab = slab.at[ROW_WKV:ROW_WKV + D, LANE_B:LANE_B + 2 * D].set(wkv)
    slab = slab.at[ROW_W1:ROW_W1 + D, LANE_B:LANE_B + F].set(p["w1"])
    slab = slab.at[ROW_POS:ROW_POS + T, LANE_B:LANE_B + D].set(pos_cat)

    vec_values = {
        "emb_ln_g": p["emb_ln_g"], "emb_ln_b": p["emb_ln_b"],
        "bq": bq_s, "bkv": bkv, "bo": p["bo"],
        "ln1_g": p["ln1_g"], "ln1_b": p["ln1_b"],
        "b1": p["b1"], "b2": p["b2"],
        "ln2_g": p["ln2_g"], "ln2_b": p["ln2_b"],
    }
    for name in VEC_NAMES:
        v = vec_values[name]
        slab = slab.at[ROW_VEC + VEC_IDX[name], LANE_B:LANE_B + v.shape[0]].set(v)
    return slab


# --------------------------------- forward ------------------------------------
def retriever_forward(input_ids, attention_mask, param_slab):
    """Equivalent of Retriever.forward: returns dialog_emb = last_hidden[:, 0, :]."""
    ids2 = input_ids.reshape(T, 1).astype(jnp.int32)             # flattened token ids
    mask_f = attention_mask.astype(jnp.float32)                  # (B, S)
    # block-diagonal key mask over the flattened (B*S) key axis: keeps each CLS
    # query attending only to its own (unpadded) sequence.
    eye = jnp.eye(B, dtype=jnp.float32)
    big = (eye[:, :, None] * mask_f[None, :, :]).reshape(B, T)   # (B, T)
    neg_mask = (1.0 - big) * (-1e9)

    # Single kernel invocation, 3 operands (ids, mask, packed parameter slab);
    # every array fits VMEM trivially so whole-array default BlockSpecs are used.
    # If B grows, add a leading "parallel" batch grid axis for v7x's 2 TCs.
    return pl.pallas_call(
        retriever_kernel,
        out_shape=jax.ShapeDtypeStruct((B, D), jnp.float32),
        cost_estimate=pl.CostEstimate(flops=226_000, transcendentals=256,
                                      bytes_accessed=67_000),
    )(ids2, neg_mask, param_slab)


if __name__ == "__main__":
    key = jax.random.PRNGKey(0)
    k_ids, k_params = jax.random.split(key)

    input_ids = jax.random.randint(k_ids, (B, S), 0, VOCAB, dtype=jnp.int32)
    attention_mask = jnp.ones((B, S), jnp.int32).at[:, -2:].set(0)  # pad last 2 tokens

    params = init_params(k_params)
    param_slab = prepare_kernel_params(params)

    fwd = jax.jit(retriever_forward)
    dialog_emb = jax.block_until_ready(fwd(input_ids, attention_mask, param_slab))

    assert dialog_emb.shape == (B, D) and dialog_emb.dtype == jnp.float32
    assert bool(jnp.all(jnp.isfinite(dialog_emb)))
    print("KERNEL_OK")
</pallas_src>

<mosaic_0001>
module attributes {stable_mosaic.version = 11 : i64} {
  func.func @retriever_kernel(%arg0: memref<16x1xi32, #tpu.memory_space<vmem>>, %arg1: memref<2x16xf32, #tpu.memory_space<vmem>>, %arg2: memref<128x128xf32, #tpu.memory_space<vmem>>, %arg3: memref<2x32xf32, #tpu.memory_space<vmem>>) attributes {dimension_semantics = [], scalar_prefetch = 0 : i64, scratch_operands = 0 : i64, tpu.core_type = #tpu.core_type<tc>} {
    %c0 = arith.constant 0 : index
    %c0_0 = arith.constant 0 : index
    %0 = vector.load %arg0[%c0, %c0_0] : memref<16x1xi32, #tpu.memory_space<vmem>>, vector<16x1xi32>
    %1 = tpu.iota {dimensions = array<i32: 1>} : vector<16x128xi32>
    %2 = vector.broadcast %0 : vector<16x1xi32> to vector<16x128xi32>
    %3 = arith.cmpi eq, %2, %1 : vector<16x128xi32>
    %4 = arith.extui %3 : vector<16x128xi1> to vector<16x128xi32>
    %5 = arith.sitofp %4 : vector<16x128xi32> to vector<16x128xf32>
    %c0_1 = arith.constant 0 : index
    %c0_2 = arith.constant 0 : index
    %6 = vector.load %arg2[%c0_1, %c0_2] : memref<128x128xf32, #tpu.memory_space<vmem>>, vector<128x32xf32>
    %c64 = arith.constant 64 : index
    %c64_3 = arith.constant 64 : index
    %7 = vector.load %arg2[%c64, %c64_3] : memref<128x128xf32, #tpu.memory_space<vmem>>, vector<16x32xf32>
    %cst = arith.constant dense<0.000000e+00> : vector<16x32xf32>
    %8 = tpu.matmul %5, %6, %cst {dimension_numbers = #tpu.dot_dimension_numbers<[1], [0], [0], [1], [0, 0, 1, 1], [], []>} : vector<16x128xf32>, vector<128x32xf32>, vector<16x32xf32> -> vector<16x32xf32>
    %9 = arith.addf %8, %7 : vector<16x32xf32>
    %c80 = arith.constant 80 : index
    %c64_4 = arith.constant 64 : index
    %10 = vector.load %arg2[%c80, %c64_4] : memref<128x128xf32, #tpu.memory_space<vmem>>, vector<1x32xf32>
    %c81 = arith.constant 81 : index
    %c64_5 = arith.constant 64 : index
    %11 = vector.load %arg2[%c81, %c64_5] : memref<128x128xf32, #tpu.memory_space<vmem>>, vector<1x32xf32>
    %cst_6 = arith.constant dense<0.000000e+00> : vector<16xf32>
    %12 = vector.multi_reduction <add>, %9, %cst_6 [1] : vector<16x32xf32> to vector<16xf32>
    %13 = vector.shape_cast %12 : vector<16xf32> to vector<16x1xf32>
    %cst_7 = arith.constant 3.200000e+01 : f32
    %14 = vector.broadcast %cst_7 : f32 to vector<16x1xf32>
    %15 = arith.divf %13, %14 : vector<16x1xf32>
    %16 = arith.mulf %9, %9 : vector<16x32xf32>
    %cst_8 = arith.constant dense<0.000000e+00> : vector<16xf32>
    %17 = vector.multi_reduction <add>, %16, %cst_8 [1] : vector<16x32xf32> to vector<16xf32>
    %18 = vector.shape_cast %17 : vector<16xf32> to vector<16x1xf32>
    %cst_9 = arith.constant 3.200000e+01 : f32
    %19 = vector.broadcast %cst_9 : f32 to vector<16x1xf32>
    %20 = arith.divf %18, %19 : vector<16x1xf32>
    %21 = arith.mulf %15, %15 : vector<16x1xf32>
    %22 = arith.subf %20, %21 : vector<16x1xf32>
    %23 = vector.broadcast %15 : vector<16x1xf32> to vector<16x32xf32>
    %24 = arith.subf %9, %23 : vector<16x32xf32>
    %cst_10 = arith.constant 9.99999996E-13 : f32
    %25 = vector.broadcast %cst_10 : f32 to vector<16x1xf32>
    %26 = arith.addf %22, %25 : vector<16x1xf32>
    %27 = math.rsqrt %26 : vector<16x1xf32>
    %28 = vector.broadcast %27 : vector<16x1xf32> to vector<16x32xf32>
    %29 = arith.mulf %24, %28 : vector<16x32xf32>
    %30 = vector.broadcast %10 : vector<1x32xf32> to vector<16x32xf32>
    %31 = arith.mulf %29, %30 : vector<16x32xf32>
    %32 = vector.broadcast %11 : vector<1x32xf32> to vector<16x32xf32>
    %33 = arith.addf %31, %32 : vector<16x32xf32>
    %34 = vector.extract_strided_slice %33 {offsets = [0, 0], sizes = [1, 32], strides = [1, 1]} : vector<16x32xf32> to vector<1x32xf32>
    %35 = vector.extract_strided_slice %33 {offsets = [8, 0], sizes = [1, 32], strides = [1, 1]} : vector<16x32xf32> to vector<1x32xf32>
    %36 = tpu.concatenate %34, %35 in 0 : vector<1x32xf32>, vector<1x32xf32> -> vector<2x32xf32>
    %c0_11 = arith.constant 0 : index
    %c0_12 = arith.constant 0 : index
    %37 = vector.load %arg1[%c0_11, %c0_12] : memref<2x16xf32, #tpu.memory_space<vmem>>, vector<2x16xf32>
    %c0_13 = arith.constant 0 : index
    %c32 = arith.constant 32 : index
    %38 = vector.load %arg2[%c0_13, %c32] : memref<128x128xf32, #tpu.memory_space<vmem>>, vector<32x32xf32>
    %cst_14 = arith.constant dense<0.000000e+00> : vector<2x32xf32>
    %39 = tpu.matmul %36, %38, %cst_14 {dimension_numbers = #tpu.dot_dimension_numbers<[1], [0], [0], [1], [0, 0, 1, 1], [], []>} : vector<2x32xf32>, vector<32x32xf32>, vector<2x32xf32> -> vector<2x32xf32>
    %c82 = arith.constant 82 : index
    %c64_15 = arith.constant 64 : index
    %40 = vector.load %arg2[%c82, %c64_15] : memref<128x128xf32, #tpu.memory_space<vmem>>, vector<1x32xf32>
    %41 = vector.broadcast %40 : vector<1x32xf32> to vector<2x32xf32>
    %42 = arith.addf %39, %41 : vector<2x32xf32>
    %c0_16 = arith.constant 0 : index
    %c64_17 = arith.constant 64 : index
    %43 = vector.load %arg2[%c0_16, %c64_17] : memref<128x128xf32, #tpu.memory_space<vmem>>, vector<32x64xf32>
    %cst_18 = arith.constant dense<0.000000e+00> : vector<16x64xf32>
    %44 = tpu.matmul %33, %43, %cst_18 {dimension_numbers = #tpu.dot_dimension_numbers<[1], [0], [0], [1], [0, 0, 1, 1], [], []>} : vector<16x32xf32>, vector<32x64xf32>, vector<16x64xf32> -> vector<16x64xf32>
    %c83 = arith.constant 83 : index
    %c64_19 = arith.constant 64 : index
    %45 = vector.load %arg2[%c83, %c64_19] : memref<128x128xf32, #tpu.memory_space<vmem>>, vector<1x64xf32>
    %46 = vector.broadcast %45 : vector<1x64xf32> to vector<16x64xf32>
    %47 = arith.addf %44, %46 : vector<16x64xf32>
    %48 = vector.extract_strided_slice %47 {offsets = [0, 0], sizes = [16, 32], strides = [1, 1]} : vector<16x64xf32> to vector<16x32xf32>
    %49 = vector.extract_strided_slice %47 {offsets = [0, 32], sizes = [16, 32], strides = [1, 1]} : vector<16x64xf32> to vector<16x32xf32>
    %50 = vector.extract_strided_slice %42 {offsets = [0, 0], sizes = [2, 16], strides = [1, 1]} : vector<2x32xf32> to vector<2x16xf32>
    %51 = vector.extract_strided_slice %48 {offsets = [0, 0], sizes = [16, 16], strides = [1, 1]} : vector<16x32xf32> to vector<16x16xf32>
    %cst_20 = arith.constant dense<0.000000e+00> : vector<2x16xf32>
    %52 = tpu.matmul %50, %51, %cst_20 {dimension_numbers = #tpu.dot_dimension_numbers<[1], [1], [0], [0], [0, 0, 1, 0], [], []>} : vector<2x16xf32>, vector<16x16xf32>, vector<2x16xf32> -> vector<2x16xf32>
    %53 = arith.addf %52, %37 : vector<2x16xf32>
    %cst_21 = arith.constant dense<0xFF800000> : vector<2xf32>
    %54 = vector.multi_reduction <maximumf>, %53, %cst_21 [1] : vector<2x16xf32> to vector<2xf32>
    %55 = vector.shape_cast %54 : vector<2xf32> to vector<2x1xf32>
    %56 = vector.broadcast %55 : vector<2x1xf32> to vector<2x16xf32>
    %57 = arith.subf %53, %56 : vector<2x16xf32>
    %58 = math.exp %57 : vector<2x16xf32>
    %cst_22 = arith.constant dense<0.000000e+00> : vector<2xf32>
    %59 = vector.multi_reduction <add>, %58, %cst_22 [1] : vector<2x16xf32> to vector<2xf32>
    %60 = vector.shape_cast %59 : vector<2xf32> to vector<2x1xf32>
    %61 = tpu.reciprocal %60 {approx = true} : vector<2x1xf32> -> vector<2x1xf32>
    %62 = vector.broadcast %61 : vector<2x1xf32> to vector<2x16xf32>
    %63 = arith.mulf %58, %62 : vector<2x16xf32>
    %64 = vector.extract_strided_slice %49 {offsets = [0, 0], sizes = [16, 16], strides = [1, 1]} : vector<16x32xf32> to vector<16x16xf32>
    %cst_23 = arith.constant dense<0.000000e+00> : vector<2x16xf32>
    %65 = tpu.matmul %63, %64, %cst_23 {dimension_numbers = #tpu.dot_dimension_numbers<[1], [0], [0], [1], [0, 0, 1, 1], [], []>} : vector<2x16xf32>, vector<16x16xf32>, vector<2x16xf32> -> vector<2x16xf32>
    %66 = vector.extract_strided_slice %42 {offsets = [0, 16], sizes = [2, 16], strides = [1, 1]} : vector<2x32xf32> to vector<2x16xf32>
    %67 = vector.extract_strided_slice %48 {offsets = [0, 16], sizes = [16, 16], strides = [1, 1]} : vector<16x32xf32> to vector<16x16xf32>
    %cst_24 = arith.constant dense<0.000000e+00> : vector<2x16xf32>
    %68 = tpu.matmul %66, %67, %cst_24 {dimension_numbers = #tpu.dot_dimension_numbers<[1], [1], [0], [0], [0, 0, 1, 0], [], []>} : vector<2x16xf32>, vector<16x16xf32>, vector<2x16xf32> -> vector<2x16xf32>
    %69 = arith.addf %68, %37 : vector<2x16xf32>
    %cst_25 = arith.constant dense<0xFF800000> : vector<2xf32>
    %70 = vector.multi_reduction <maximumf>, %69, %cst_25 [1] : vector<2x16xf32> to vector<2xf32>
    %71 = vector.shape_cast %70 : vector<2xf32> to vector<2x1xf32>
    %72 = vector.broadcast %71 : vector<2x1xf32> to vector<2x16xf32>
    %73 = arith.subf %69, %72 : vector<2x16xf32>
    %74 = math.exp %73 : vector<2x16xf32>
    %cst_26 = arith.constant dense<0.000000e+00> : vector<2xf32>
    %75 = vector.multi_reduction <add>, %74, %cst_26 [1] : vector<2x16xf32> to vector<2xf32>
    %76 = vector.shape_cast %75 : vector<2xf32> to vector<2x1xf32>
    %77 = tpu.reciprocal %76 {approx = true} : vector<2x1xf32> -> vector<2x1xf32>
    %78 = vector.broadcast %77 : vector<2x1xf32> to vector<2x16xf32>
    %79 = arith.mulf %74, %78 : vector<2x16xf32>
    %80 = vector.extract_strided_slice %49 {offsets = [0, 16], sizes = [16, 16], strides = [1, 1]} : vector<16x32xf32> to vector<16x16xf32>
    %cst_27 = arith.constant dense<0.000000e+00> : vector<2x16xf32>
    %81 = tpu.matmul %79, %80, %cst_27 {dimension_numbers = #tpu.dot_dimension_numbers<[1], [0], [0], [1], [0, 0, 1, 1], [], []>} : vector<2x16xf32>, vector<16x16xf32>, vector<2x16xf32> -> vector<2x16xf32>
    %82 = tpu.concatenate %65, %81 in 1 : vector<2x16xf32>, vector<2x16xf32> -> vector<2x32xf32>
    %c32_28 = arith.constant 32 : index
    %c32_29 = arith.constant 32 : index
    %83 = vector.load %arg2[%c32_28, %c32_29] : memref<128x128xf32, #tpu.memory_space<vmem>>, vector<32x32xf32>
    %cst_30 = arith.constant dense<0.000000e+00> : vector<2x32xf32>
    %84 = tpu.matmul %82, %83, %cst_30 {dimension_numbers = #tpu.dot_dimension_numbers<[1], [0], [0], [1], [0, 0, 1, 1], [], []>} : vector<2x32xf32>, vector<32x32xf32>, vector<2x32xf32> -> vector<2x32xf32>
    %c84 = arith.constant 84 : index
    %c64_31 = arith.constant 64 : index
    %85 = vector.load %arg2[%c84, %c64_31] : memref<128x128xf32, #tpu.memory_space<vmem>>, vector<1x32xf32>
    %86 = vector.broadcast %85 : vector<1x32xf32> to vector<2x32xf32>
    %87 = arith.addf %84, %86 : vector<2x32xf32>
    %88 = arith.addf %36, %87 : vector<2x32xf32>
    %c85 = arith.constant 85 : index
    %c64_32 = arith.constant 64 : index
    %89 = vector.load %arg2[%c85, %c64_32] : memref<128x128xf32, #tpu.memory_space<vmem>>, vector<1x32xf32>
    %c86 = arith.constant 86 : index
    %c64_33 = arith.constant 64 : index
    %90 = vector.load %arg2[%c86, %c64_33] : memref<128x128xf32, #tpu.memory_space<vmem>>, vector<1x32xf32>
    %cst_34 = arith.constant dense<0.000000e+00> : vector<2xf32>
    %91 = vector.multi_reduction <add>, %88, %cst_34 [1] : vector<2x32xf32> to vector<2xf32>
    %92 = vector.shape_cast %91 : vector<2xf32> to vector<2x1xf32>
    %cst_35 = arith.constant 3.200000e+01 : f32
    %93 = vector.broadcast %cst_35 : f32 to vector<2x1xf32>
    %94 = arith.divf %92, %93 : vector<2x1xf32>
    %95 = arith.mulf %88, %88 : vector<2x32xf32>
    %cst_36 = arith.constant dense<0.000000e+00> : vector<2xf32>
    %96 = vector.multi_reduction <add>, %95, %cst_36 [1] : vector<2x32xf32> to vector<2xf32>
    %97 = vector.shape_cast %96 : vector<2xf32> to vector<2x1xf32>
    %cst_37 = arith.constant 3.200000e+01 : f32
    %98 = vector.broadcast %cst_37 : f32 to vector<2x1xf32>
    %99 = arith.divf %97, %98 : vector<2x1xf32>
    %100 = arith.mulf %94, %94 : vector<2x1xf32>
    %101 = arith.subf %99, %100 : vector<2x1xf32>
    %102 = vector.broadcast %94 : vector<2x1xf32> to vector<2x32xf32>
    %103 = arith.subf %88, %102 : vector<2x32xf32>
    %cst_38 = arith.constant 9.99999996E-13 : f32
    %104 = vector.broadcast %cst_38 : f32 to vector<2x1xf32>
    %105 = arith.addf %101, %104 : vector<2x1xf32>
    %106 = math.rsqrt %105 : vector<2x1xf32>
    %107 = vector.broadcast %106 : vector<2x1xf32> to vector<2x32xf32>
    %108 = arith.mulf %103, %107 : vector<2x32xf32>
    %109 = vector.broadcast %89 : vector<1x32xf32> to vector<2x32xf32>
    %110 = arith.mulf %108, %109 : vector<2x32xf32>
    %111 = vector.broadcast %90 : vector<1x32xf32> to vector<2x32xf32>
    %112 = arith.addf %110, %111 : vector<2x32xf32>
    %c32_39 = arith.constant 32 : index
    %c64_40 = arith.constant 64 : index
    %113 = vector.load %arg2[%c32_39, %c64_40] : memref<128x128xf32, #tpu.memory_space<vmem>>, vector<32x64xf32>
    %cst_41 = arith.constant dense<0.000000e+00> : vector<2x64xf32>
    %114 = tpu.matmul %112, %113, %cst_41 {dimension_numbers = #tpu.dot_dimension_numbers<[1], [0], [0], [1], [0, 0, 1, 1], [], []>} : vector<2x32xf32>, vector<32x64xf32>, vector<2x64xf32> -> vector<2x64xf32>
    %c87 = arith.constant 87 : index
    %c64_42 = arith.constant 64 : index
    %115 = vector.load %arg2[%c87, %c64_42] : memref<128x128xf32, #tpu.memory_space<vmem>>, vector<1x64xf32>
    %116 = vector.broadcast %115 : vector<1x64xf32> to vector<2x64xf32>
    %117 = arith.addf %114, %116 : vector<2x64xf32>
    %118 = arith.mulf %117, %117 : vector<2x64xf32>
    %119 = arith.mulf %117, %118 : vector<2x64xf32>
    %cst_43 = arith.constant 4.471500e-02 : f32
    %120 = vector.broadcast %cst_43 : f32 to vector<2x64xf32>
    %121 = arith.mulf %120, %119 : vector<2x64xf32>
    %122 = arith.addf %117, %121 : vector<2x64xf32>
    %cst_44 = arith.constant 0.797884583 : f32
    %123 = vector.broadcast %cst_44 : f32 to vector<2x64xf32>
    %124 = arith.mulf %123, %122 : vector<2x64xf32>
    %125 = math.tanh %124 : vector<2x64xf32>
    %cst_45 = arith.constant 1.000000e+00 : f32
    %126 = vector.broadcast %cst_45 : f32 to vector<2x64xf32>
    %127 = arith.addf %126, %125 : vector<2x64xf32>
    %cst_46 = arith.constant 5.000000e-01 : f32
    %128 = vector.broadcast %cst_46 : f32 to vector<2x64xf32>
    %129 = arith.mulf %128, %127 : vector<2x64xf32>
    %130 = arith.mulf %117, %129 : vector<2x64xf32>
    %c64_47 = arith.constant 64 : index
    %c32_48 = arith.constant 32 : index
    %131 = vector.load %arg2[%c64_47, %c32_48] : memref<128x128xf32, #tpu.memory_space<vmem>>, vector<64x32xf32>
    %cst_49 = arith.constant dense<0.000000e+00> : vector<2x32xf32>
    %132 = tpu.matmul %130, %131, %cst_49 {dimension_numbers = #tpu.dot_dimension_numbers<[1], [0], [0], [1], [0, 0, 1, 1], [], []>} : vector<2x64xf32>, vector<64x32xf32>, vector<2x32xf32> -> vector<2x32xf32>
    %c88 = arith.constant 88 : index
    %c64_50 = arith.constant 64 : index
    %133 = vector.load %arg2[%c88, %c64_50] : memref<128x128xf32, #tpu.memory_space<vmem>>, vector<1x32xf32>
    %134 = vector.broadcast %133 : vector<1x32xf32> to vector<2x32xf32>
    %135 = arith.addf %132, %134 : vector<2x32xf32>
    %136 = arith.addf %112, %135 : vector<2x32xf32>
    %c89 = arith.constant 89 : index
    %c64_51 = arith.constant 64 : index
    %137 = vector.load %arg2[%c89, %c64_51] : memref<128x128xf32, #tpu.memory_space<vmem>>, vector<1x32xf32>
    %c90 = arith.constant 90 : index
    %c64_52 = arith.constant 64 : index
    %138 = vector.load %arg2[%c90, %c64_52] : memref<128x128xf32, #tpu.memory_space<vmem>>, vector<1x32xf32>
    %cst_53 = arith.constant dense<0.000000e+00> : vector<2xf32>
    %139 = vector.multi_reduction <add>, %136, %cst_53 [1] : vector<2x32xf32> to vector<2xf32>
    %140 = vector.shape_cast %139 : vector<2xf32> to vector<2x1xf32>
    %cst_54 = arith.constant 3.200000e+01 : f32
    %141 = vector.broadcast %cst_54 : f32 to vector<2x1xf32>
    %142 = arith.divf %140, %141 : vector<2x1xf32>
    %143 = arith.mulf %136, %136 : vector<2x32xf32>
    %cst_55 = arith.constant dense<0.000000e+00> : vector<2xf32>
    %144 = vector.multi_reduction <add>, %143, %cst_55 [1] : vector<2x32xf32> to vector<2xf32>
    %145 = vector.shape_cast %144 : vector<2xf32> to vector<2x1xf32>
    %cst_56 = arith.constant 3.200000e+01 : f32
    %146 = vector.broadcast %cst_56 : f32 to vector<2x1xf32>
    %147 = arith.divf %145, %146 : vector<2x1xf32>
    %148 = arith.mulf %142, %142 : vector<2x1xf32>
    %149 = arith.subf %147, %148 : vector<2x1xf32>
    %150 = vector.broadcast %142 : vector<2x1xf32> to vector<2x32xf32>
    %151 = arith.subf %136, %150 : vector<2x32xf32>
    %cst_57 = arith.constant 9.99999996E-13 : f32
    %152 = vector.broadcast %cst_57 : f32 to vector<2x1xf32>
    %153 = arith.addf %149, %152 : vector<2x1xf32>
    %154 = math.rsqrt %153 : vector<2x1xf32>
    %155 = vector.broadcast %154 : vector<2x1xf32> to vector<2x32xf32>
    %156 = arith.mulf %151, %155 : vector<2x32xf32>
    %157 = vector.broadcast %137 : vector<1x32xf32> to vector<2x32xf32>
    %158 = arith.mulf %156, %157 : vector<2x32xf32>
    %159 = vector.broadcast %138 : vector<1x32xf32> to vector<2x32xf32>
    %160 = arith.addf %158, %159 : vector<2x32xf32>
    %c0_58 = arith.constant 0 : index
    %c0_59 = arith.constant 0 : index
    %161 = vector.load %arg3[%c0_58, %c0_59] : memref<2x32xf32, #tpu.memory_space<vmem>>, vector<2x32xf32>
    tpu.vector_store %arg3[%c0_58, %c0_59], %160 {strides = array<i32>} : memref<2x32xf32, #tpu.memory_space<vmem>>, vector<2x32xf32>,
    return
  }
}

</mosaic_0001>

<llo_original>
// kernel: retriever_forward.1
$region0: #{retriever_forward.1}
  #allocation0 [shape = 'u32[]', space=smem, size = 0x4, offset = 0x4, fixed_abs, tag = 'smem constant byte address 0x4 - core index']
  #allocation1 [shape = 'u32[144,128]{1,0:T(1,128)}', space=vmem, size = 0x12000, scoped, tag = 'internal scratch']
  %s0 = inlined_call_operand.vmem [shape: s32[16,1], index: 0, kind: input, shape index: {}]
  %s1 = inlined_call_operand.vmem [shape: f32[2,16], index: 1, kind: input, shape index: {}]
  %s2 = inlined_call_operand.hbm [shape: f32[128,128], index: 2, kind: input, shape index: {}]
  %s3 = inlined_call_operand.hbm [shape: f32[2,32], index: 3, kind: output, shape index: {}]
  %s4 = sld [smem:[#allocation0]]
  $region26: #{retriever_forward.1} parent=0
    _
  %s6 = ssub.s32 1, %s4
  %s7 = scalar_select 0, %s6, %s4
  $region1: #{retriever_forward.1} parent=0
    #allocation2 [shape = 'u8[65536]{0}', space=vmem, size = 0x10000, scoped, tag = 'input window, operand 2, single buffered']
    #allocation3 [shape = 's32[1]{0}', space=sflag, size = 0x4, scoped, tag = 'scoped memory for retriever_forward.1']
    #allocation4 [shape = 's32[1]{0}', space=sflag, size = 0x4, scoped, tag = 'scoped memory for retriever_forward.1']
    #allocation5 [shape = 'u8[1024]{0}', space=vmem, size = 0x400, scoped, tag = 'output window, operand 0, single buffered']
    %8 = vsyncpa [#allocation3], 0
    %9 = vsyncpa [#allocation4], 0
    // Predicated region
    $region2: #{retriever_forward.1} parent=1 // pred_check
      _
    $region3: #{retriever_forward.1} parent=1 // pred_check_branch
      %11 = sbr.rel (0) target = $region5
    $region4: #{retriever_forward.1} parent=1 // pred_region
      _
    $region5: #{retriever_forward.1} parent=1 // pred_fallthru
      _
    // Predicated region
    $region6: #{retriever_forward.1} parent=1 // pred_check
      _
    $region7: #{retriever_forward.1} parent=1 // pred_check_branch
      %13 = sbr.rel (0) target = $region9
    $region8: #{retriever_forward.1} parent=1 // pred_region
      _
    $region9: #{retriever_forward.1} parent=1 // pred_fallthru
      _
    // Predicated region
    $region10: #{retriever_forward.1} parent=1 // pred_check
      _
    $region11: #{retriever_forward.1} parent=1 // pred_check_branch
      %15 = sbr.rel (0) target = $region13
    $region12: #{retriever_forward.1} parent=1 // pred_region
      %s17 = ssub.s32 2048, 2048
      %18 = vsyncadd [#allocation3], %s17
      %s19 = sshll.u32 [#allocation2], 4
      %s20 = int_to_ptr.vmem [resolvable:$true] %s19
      %25 = dma.hbm_to_vmem [thread:$0]  %s2, 2048, %s20, [#allocation3], 128, 128, 8
    $region13: #{retriever_forward.1} parent=1 // pred_fallthru
      _
    // Predicated region
    $region14: #{retriever_forward.1} parent=1 // pred_check
      _
    $region15: #{retriever_forward.1} parent=1 // pred_check_branch
      %27 = sbr.rel (0) target = $region17
    $region16: #{retriever_forward.1} parent=1 // pred_region
      %28 = dma.done [#allocation3], 2048
    $region17: #{retriever_forward.1} parent=1 // pred_fallthru
      _
    %v29 = vld [vmem:[%s0] sm:$0xff]
    %v30 = vld [vmem:[%s0 + $0x8] sm:$0xff]
    %v31 = vlaneseq
    %v32 = vand.u32 %v31, 127
    %33 = vset.pattern.permute.xlu0 0
    %34 = vperm.xlu0 %33, %v29
    %v35 = vpop.permute.xlu0 %34
    %36 = vset.pattern.permute.xlu0 0
    %37 = vperm.xlu0 %36, %v30
    %v38 = vpop.permute.xlu0 %37
    %vm39 = vcmp.eq.s32.totalorder %v35, %v32
    %vm40 = vcmp.eq.s32.totalorder %v38, %v32
    %v41 = vsel %vm39, 1, 0
    %v42 = vsel %vm40, 1, 0
    %v43 = vcvt.s32.f32 %v41
    %v44 = vcvt.s32.f32 %v42
    %v45 = vld [vmem:[#allocation2] sm:$0xff]
    %v46 = vld [vmem:[#allocation2 + $0x8] sm:$0xff]
    %v47 = vld [vmem:[#allocation2 + $0x10] sm:$0xff]
    %v48 = vld [vmem:[#allocation2 + $0x18] sm:$0xff]
    %v49 = vld [vmem:[#allocation2 + $0x20] sm:$0xff]
    %v50 = vld [vmem:[#allocation2 + $0x28] sm:$0xff]
    %v51 = vld [vmem:[#allocation2 + $0x30] sm:$0xff]
    %v52 = vld [vmem:[#allocation2 + $0x38] sm:$0xff]
    %v53 = vld [vmem:[#allocation2 + $0x40] sm:$0xff]
    %v54 = vld [vmem:[#allocation2 + $0x48] sm:$0xff]
    %v55 = vld [vmem:[#allocation2 + $0x50] sm:$0xff]
    %v56 = vld [vmem:[#allocation2 + $0x58] sm:$0xff]
    %v57 = vld [vmem:[#allocation2 + $0x60] sm:$0xff]
    %v58 = vld [vmem:[#allocation2 + $0x68] sm:$0xff]
    %v59 = vld [vmem:[#allocation2 + $0x70] sm:$0xff]
    %v60 = vld [vmem:[#allocation2 + $0x78] sm:$0xff]
    %v61 = vld [vmem:[#allocation2 + $0x40] sm:$0xff]
    %v62 = vld [vmem:[#allocation2 + $0x48] sm:$0xff]
    %65 = vrot.lane.b32.xlu0 %v61, 64
    %v66 = vpop.permute.xlu0 %65
    %67 = vrot.lane.b32.xlu0 %v62, 64
    %v68 = vpop.permute.xlu0 %67
    %71 = vmatprep.subr.mxu0 0.0
    %72 = vmatpush1.msra.mxu0 %v45
    %73 = vmatprep.subr.mxu0 0.0
    %74 = vmatpush1.msra.mxu0 %v46
    %75 = vmatprep.subr.mxu0 0.0
    %76 = vmatpush1.msra.mxu0 %v47
    %77 = vmatprep.subr.mxu0 0.0
    %78 = vmatpush1.msra.mxu0 %v48
    %79 = vmatprep.subr.mxu0 0.0
    %80 = vmatpush1.msra.mxu0 %v49
    %81 = vmatprep.subr.mxu0 0.0
    %82 = vmatpush1.msra.mxu0 %v50
    %83 = vmatprep.subr.mxu0 0.0
    %84 = vmatpush1.msra.mxu0 %v51
    %85 = vmatprep.subr.mxu0 0.0
    %86 = vmatpush1.msra.mxu0 %v52
    %87 = vmatprep.subr.mxu0 0.0
    %88 = vmatpush1.msra.mxu0 %v53
    %89 = vmatprep.subr.mxu0 0.0
    %90 = vmatpush1.msra.mxu0 %v54
    %91 = vmatprep.subr.mxu0 0.0
    %92 = vmatpush1.msra.mxu0 %v55
    %93 = vmatprep.subr.mxu0 0.0
    %94 = vmatpush1.msra.mxu0 %v56
    %95 = vmatprep.subr.mxu0 0.0
    %96 = vmatpush1.msra.mxu0 %v57
    %97 = vmatprep.subr.mxu0 0.0
    %98 = vmatpush1.msra.mxu0 %v58
    %99 = vmatprep.subr.mxu0 0.0
    %100 = vmatpush1.msra.mxu0 %v59
    %101 = vmatprep.subr.mxu0 0.0
    %102 = vmatpush1.msra.mxu0 %v60
    %103 = vmatprep.subr.mxu0 0.0
    %104 = vmatpush1.msra.mxu0 0.0
    %105 = vmatprep.subr.mxu0 0.0
    %106 = vmatpush1.msra.mxu0 0.0
    %107 = vmatprep.subr.mxu0 0.0
    %108 = vmatpush1.msra.mxu0 0.0
    %109 = vmatprep.subr.mxu0 0.0
    %110 = vmatpush1.msra.mxu0 0.0
    %111 = vmatprep.subr.mxu0 0.0
    %112 = vmatpush1.msra.mxu0 0.0
    %113 = vmatprep.subr.mxu0 0.0
    %114 = vmatpush1.msra.mxu0 0.0
    %115 = vmatprep.subr.mxu0 0.0
    %116 = vmatpush1.msra.mxu0 0.0
    %117 = vmatprep.subr.mxu0 0.0
    %118 = vmatpush1.msra.mxu0 0.0
    %119 = vmatprep.subr.mxu0 0.0
    %120 = vmatpush1.msra.mxu0 0.0
    %121 = vmatprep.subr.mxu0 0.0
    %122 = vmatpush1.msra.mxu0 0.0
    %123 = vmatprep.subr.mxu0 0.0
    %124 = vmatpush1.msra.mxu0 0.0
    %125 = vmatprep.subr.mxu0 0.0
    %126 = vmatpush1.msra.mxu0 0.0
    %127 = vmatprep.subr.mxu0 0.0
    %128 = vmatpush1.msra.mxu0 0.0
    %129 = vmatprep.subr.mxu0 0.0
    %130 = vmatpush1.msra.mxu0 0.0
    %131 = vmatprep.subr.mxu0 0.0
    %132 = vmatpush1.msra.mxu0 0.0
    %133 = vmatprep.subr.mxu0 0.0
    %134 = vmatpush1.msra.mxu0 0.0
    %135 = vmatprep.mubr.f32.mxu0 0.0
    %136 = vmatmul.mubr.f32.gmra.mrb[0].mxu0 %v43
    %v137 = vpop.f32.mrb[0].mxu0
    %v138 = vadd.f32 %v66, %v137
    %v139 = vpop.f32.mrb[0].mxu0
    %140 = vmatprep.mubr.f32.mxu0 0.0
    %141 = vmatmul.mubr.f32.gmra.mrb[0].mxu0 %v44
    %v142 = vpop.f32.mrb[0].mxu0
    %v143 = vadd.f32 %v68, %v142
    %v144 = vpop.f32.mrb[0].mxu0
    %145 = vdwg.mxu0
    %v146 = vld [vmem:[#allocation2 + $0x50] sm:$0x1]
    %v147 = vld [vmem:[#allocation2 + $0x51] sm:$0x1]
    %vm148 = vcmask 261120
    %v149 = vsel %vm148, %v138, 0.0
    %150 = vadd.xlane.f32.xlu0 %v149
    %v151 = vpop.xlane.xlu0 %150
    %v152 = vsel %vm148, %v143, 0.0
    %153 = vadd.xlane.f32.xlu0 %v152
    %v154 = vpop.xlane.xlu0 %153
    %v155 = vrcp.pop 32.0
    %v156 = vmul.f32 %v151, %v155
    %v157 = vmul.f32 %v154, %v155
    %v158 = vmul.f32 %v138, %v138
    %v159 = vmul.f32 %v143, %v143
    %v160 = vsel %vm148, %v158, 0.0
    %161 = vadd.xlane.f32.xlu0 %v160
    %v162 = vpop.xlane.xlu0 %161
    %v163 = vsel %vm148, %v159, 0.0
    %164 = vadd.xlane.f32.xlu0 %v163
    %v165 = vpop.xlane.xlu0 %164
    %v166 = vmul.f32 %v162, %v155
    %v167 = vmul.f32 %v165, %v155
    %v168 = vmul.f32 %v156, %v156
    %v169 = vmul.f32 %v157, %v157
    %v170 = vsub.f32 %v166, %v168
    %v171 = vsub.f32 %v167, %v169
    %v172 = vsub.f32 %v138, %v156
    %v173 = vsub.f32 %v143, %v157
    %v174 = vadd.f32 %v170, 1e-12
    %v175 = vadd.f32 %v171, 1e-12
    %v176 = vrsqrt.pop %v174
    %v177 = vrsqrt.pop %v175
    %v178 = vmul.f32 %v172, %v176
    %v179 = vmul.f32 %v173, %v177
    %v180 = vlaneseq
    %v181 = vshrl.u32 %v180, 7
    %v182 = vsub.s32 0, %v181
    %v183 = vrot.slane %v146, %v182
    %185 = vrot.lane.b32.xlu0 %v183, 64
    %v186 = vpop.permute.xlu0 %185
    %v188 = vmul.f32 %v178, %v186
    %v189 = vmul.f32 %v179, %v186
    %v190 = vlaneseq
    %v191 = vshrl.u32 %v190, 7
    %v192 = vsub.s32 0, %v191
    %v193 = vrot.slane %v147, %v192
    %195 = vrot.lane.b32.xlu0 %v193, 64
    %v196 = vpop.permute.xlu0 %195
    %v198 = vadd.f32 %v188, %v196
    %v199 = vadd.f32 %v189, %v196
    %v201 = vrot.slane %v199, 7
    %vm203 = vcmask 1040384
    %v204 = vsel %vm203, %v198, %v201
    %v205 = vld [vmem:[%s1] sm:$0x3]
    %v206 = vld [vmem:[#allocation2] sm:$0xff]
    %v207 = vld [vmem:[#allocation2 + $0x8] sm:$0xff]
    %v208 = vld [vmem:[#allocation2 + $0x10] sm:$0xff]
    %v209 = vld [vmem:[#allocation2 + $0x18] sm:$0xff]
    %v210 = vld [vmem:[#allocation2 + $0x52] sm:$0x1]
    %v211 = vlaneseq
    %v212 = vshrl.u32 %v211, 7
    %v213 = vsub.s32 0, %v212
    %v214 = vrot.slane %v210, %v213
    %219 = vrot.lane.b32.xlu0 %v206, 96
    %v220 = vpop.permute.xlu0 %219
    %221 = vrot.lane.b32.xlu0 %v207, 96
    %v222 = vpop.permute.xlu0 %221
    %223 = vrot.lane.b32.xlu0 %v208, 96
    %v224 = vpop.permute.xlu0 %223
    %225 = vrot.lane.b32.xlu0 %v209, 96
    %v226 = vpop.permute.xlu0 %225
    %232 = vrot.lane.b32.xlu0 %v214, 64
    %v233 = vpop.permute.xlu0 %232
    %v236 = vsel %vm148, %v204, 0
    %238 = vmatprep.subr.mxu0 0.0
    %239 = vmatpush1.msra.mxu0 %v220
    %240 = vmatprep.subr.mxu0 0.0
    %241 = vmatpush1.msra.mxu0 %v222
    %242 = vmatprep.subr.mxu0 0.0
    %243 = vmatpush1.msra.mxu0 %v224
    %244 = vmatprep.subr.mxu0 0.0
    %245 = vmatpush1.msra.mxu0 %v226
    %246 = vmatprep.subr.mxu0 0.0
    %247 = vmatpush1.msra.mxu0 0.0
    %248 = vmatprep.subr.mxu0 0.0
    %249 = vmatpush1.msra.mxu0 0.0
    %250 = vmatprep.subr.mxu0 0.0
    %251 = vmatpush1.msra.mxu0 0.0
    %252 = vmatprep.subr.mxu0 0.0
    %253 = vmatpush1.msra.mxu0 0.0
    %254 = vmatprep.subr.mxu0 0.0
    %255 = vmatpush1.msra.mxu0 0.0
    %256 = vmatprep.subr.mxu0 0.0
    %257 = vmatpush1.msra.mxu0 0.0
    %258 = vmatprep.subr.mxu0 0.0
    %259 = vmatpush1.msra.mxu0 0.0
    %260 = vmatprep.subr.mxu0 0.0
    %261 = vmatpush1.msra.mxu0 0.0
    %262 = vmatprep.subr.mxu0 0.0
    %263 = vmatpush1.msra.mxu0 0.0
    %264 = vmatprep.subr.mxu0 0.0
    %265 = vmatpush1.msra.mxu0 0.0
    %266 = vmatprep.subr.mxu0 0.0
    %267 = vmatpush1.msra.mxu0 0.0
    %268 = vmatprep.subr.mxu0 0.0
    %269 = vmatpush1.msra.mxu0 0.0
    %270 = vmatprep.subr.mxu0 0.0
    %271 = vmatpush1.msra.mxu0 0.0
    %272 = vmatprep.subr.mxu0 0.0
    %273 = vmatpush1.msra.mxu0 0.0
    %274 = vmatprep.subr.mxu0 0.0
    %275 = vmatpush1.msra.mxu0 0.0
    %276 = vmatprep.subr.mxu0 0.0
    %277 = vmatpush1.msra.mxu0 0.0
    %278 = vmatprep.subr.mxu0 0.0
    %279 = vmatpush1.msra.mxu0 0.0
    %280 = vmatprep.subr.mxu0 0.0
    %281 = vmatpush1.msra.mxu0 0.0
    %282 = vmatprep.subr.mxu0 0.0
    %283 = vmatpush1.msra.mxu0 0.0
    %284 = vmatprep.subr.mxu0 0.0
    %285 = vmatpush1.msra.mxu0 0.0
    %286 = vmatprep.subr.mxu0 0.0
    %287 = vmatpush1.msra.mxu0 0.0
    %288 = vmatprep.subr.mxu0 0.0
    %289 = vmatpush1.msra.mxu0 0.0
    %290 = vmatprep.subr.mxu0 0.0
    %291 = vmatpush1.msra.mxu0 0.0
    %292 = vmatprep.subr.mxu0 0.0
    %293 = vmatpush1.msra.mxu0 0.0
    %294 = vmatprep.subr.mxu0 0.0
    %295 = vmatpush1.msra.mxu0 0.0
    %296 = vmatprep.subr.mxu0 0.0
    %297 = vmatpush1.msra.mxu0 0.0
    %298 = vmatprep.subr.mxu0 0.0
    %299 = vmatpush1.msra.mxu0 0.0
    %300 = vmatprep.subr.mxu0 0.0
    %301 = vmatpush1.msra.mxu0 0.0
    %302 = vmatprep.mubr.f32.mxu0 0.0
    %303 = vmatmul.mubr.f32.gmra.mrb[0].mxu0 %v236
    %v304 = vpop.f32.mrb[0].mxu0
    %v305 = vadd.f32 %v233, %v304
    %v306 = vpop.f32.mrb[0].mxu0
    %307 = vdwg.mxu0
    %v308 = vld [vmem:[#allocation2 + $0x53] sm:$0x1]
    %v309 = vlaneseq
    %v310 = vshrl.u32 %v309, 7
    %v311 = vsub.s32 0, %v310
    %v312 = vrot.slane %v308, %v311
    %313 = vrot.lane.b32.xlu0 %v206, 64
    %v314 = vpop.permute.xlu0 %313
    %315 = vrot.lane.b32.xlu0 %v207, 64
    %v316 = vpop.permute.xlu0 %315
    %317 = vrot.lane.b32.xlu0 %v208, 64
    %v318 = vpop.permute.xlu0 %317
    %319 = vrot.lane.b32.xlu0 %v209, 64
    %v320 = vpop.permute.xlu0 %319
    %326 = vrot.lane.b32.xlu0 %v312, 64
    %v327 = vpop.permute.xlu0 %326
    %v330 = vsel %vm148, %v198, 0
    %v332 = vsel %vm148, %v199, 0
    %334 = vmatprep.subr.mxu0 0.0
    %335 = vmatpush1.msra.mxu0 %v314
    %336 = vmatprep.subr.mxu0 0.0
    %337 = vmatpush1.msra.mxu0 %v316
    %338 = vmatprep.subr.mxu0 0.0
    %339 = vmatpush1.msra.mxu0 %v318
    %340 = vmatprep.subr.mxu0 0.0
    %341 = vmatpush1.msra.mxu0 %v320
    %342 = vmatprep.subr.mxu0 0.0
    %343 = vmatpush1.msra.mxu0 0.0
    %344 = vmatprep.subr.mxu0 0.0
    %345 = vmatpush1.msra.mxu0 0.0
    %346 = vmatprep.subr.mxu0 0.0
    %347 = vmatpush1.msra.mxu0 0.0
    %348 = vmatprep.subr.mxu0 0.0
    %349 = vmatpush1.msra.mxu0 0.0
    %350 = vmatprep.subr.mxu0 0.0
    %351 = vmatpush1.msra.mxu0 0.0
    %352 = vmatprep.subr.mxu0 0.0
    %353 = vmatpush1.msra.mxu0 0.0
    %354 = vmatprep.subr.mxu0 0.0
    %355 = vmatpush1.msra.mxu0 0.0
    %356 = vmatprep.subr.mxu0 0.0
    %357 = vmatpush1.msra.mxu0 0.0
    %358 = vmatprep.subr.mxu0 0.0
    %359 = vmatpush1.msra.mxu0 0.0
    %360 = vmatprep.subr.mxu0 0.0
    %361 = vmatpush1.msra.mxu0 0.0
    %362 = vmatprep.subr.mxu0 0.0
    %363 = vmatpush1.msra.mxu0 0.0
    %364 = vmatprep.subr.mxu0 0.0
    %365 = vmatpush1.msra.mxu0 0.0
    %366 = vmatprep.subr.mxu0 0.0
    %367 = vmatpush1.msra.mxu0 0.0
    %368 = vmatprep.subr.mxu0 0.0
    %369 = vmatpush1.msra.mxu0 0.0
    %370 = vmatprep.subr.mxu0 0.0
    %371 = vmatpush1.msra.mxu0 0.0
    %372 = vmatprep.subr.mxu0 0.0
    %373 = vmatpush1.msra.mxu0 0.0
    %374 = vmatprep.subr.mxu0 0.0
    %375 = vmatpush1.msra.mxu0 0.0
    %376 = vmatprep.subr.mxu0 0.0
    %377 = vmatpush1.msra.mxu0 0.0
    %378 = vmatprep.subr.mxu0 0.0
    %379 = vmatpush1.msra.mxu0 0.0
    %380 = vmatprep.subr.mxu0 0.0
    %381 = vmatpush1.msra.mxu0 0.0
    %382 = vmatprep.subr.mxu0 0.0
    %383 = vmatpush1.msra.mxu0 0.0
    %384 = vmatprep.subr.mxu0 0.0
    %385 = vmatpush1.msra.mxu0 0.0
    %386 = vmatprep.subr.mxu0 0.0
    %387 = vmatpush1.msra.mxu0 0.0
    %388 = vmatprep.subr.mxu0 0.0
    %389 = vmatpush1.msra.mxu0 0.0
    %390 = vmatprep.subr.mxu0 0.0
    %391 = vmatpush1.msra.mxu0 0.0
    %392 = vmatprep.subr.mxu0 0.0
    %393 = vmatpush1.msra.mxu0 0.0
    %394 = vmatprep.subr.mxu0 0.0
    %395 = vmatpush1.msra.mxu0 0.0
    %396 = vmatprep.subr.mxu0 0.0
    %397 = vmatpush1.msra.mxu0 0.0
    %398 = vmatprep.mubr.f32.mxu0 0.0
    %399 = vmatmul.mubr.f32.gmra.mrb[0].mxu0 %v330
    %v400 = vpop.f32.mrb[0].mxu0
    %v401 = vadd.f32 %v327, %v400
    %v402 = vpop.f32.mrb[0].mxu0
    %403 = vmatprep.mubr.f32.mxu0 0.0
    %404 = vmatmul.mubr.f32.gmra.mrb[0].mxu0 %v332
    %v405 = vpop.f32.mrb[0].mxu0
    %v406 = vadd.f32 %v327, %v405
    %v407 = vpop.f32.mrb[0].mxu0
    %408 = vdwg.mxu0
    %vm409 = vcmask 130048
    %v411 = vsel %vm409, %v305, 0
    %v414 = vsel %vm409, %v401, 0
    %v417 = vsel %vm409, %v406, 0
    %419 = vmatprep.subr.mxu0 0.0
    %420 = vmatpush1.xpose.msra.mxu0 %v414
    %421 = vmatprep.subr.mxu0 0.0
    %422 = vmatpush1.xpose.msra.mxu0 %v417
    %423 = vmatprep.subr.mxu0 0.0
    %424 = vmatpush1.xpose.msra.mxu0 0.0
    %425 = vmatprep.subr.mxu0 0.0
    %426 = vmatpush1.xpose.msra.mxu0 0.0
    %427 = vmatprep.subr.mxu0 0.0
    %428 = vmatpush1.xpose.msra.mxu0 0.0
    %429 = vmatprep.subr.mxu0 0.0
    %430 = vmatpush1.xpose.msra.mxu0 0.0
    %431 = vmatprep.subr.mxu0 0.0
    %432 = vmatpush1.xpose.msra.mxu0 0.0
    %433 = vmatprep.subr.mxu0 0.0
    %434 = vmatpush1.xpose.msra.mxu0 0.0
    %435 = vmatprep.subr.mxu0 0.0
    %436 = vmatpush1.xpose.msra.mxu0 0.0
    %437 = vmatprep.subr.mxu0 0.0
    %438 = vmatpush1.xpose.msra.mxu0 0.0
    %439 = vmatprep.subr.mxu0 0.0
    %440 = vmatpush1.xpose.msra.mxu0 0.0
    %441 = vmatprep.subr.mxu0 0.0
    %442 = vmatpush1.xpose.msra.mxu0 0.0
    %443 = vmatprep.subr.mxu0 0.0
    %444 = vmatpush1.xpose.msra.mxu0 0.0
    %445 = vmatprep.subr.mxu0 0.0
    %446 = vmatpush1.xpose.msra.mxu0 0.0
    %447 = vmatprep.subr.mxu0 0.0
    %448 = vmatpush1.xpose.msra.mxu0 0.0
    %449 = vmatprep.subr.mxu0 0.0
    %450 = vmatpush1.xpose.msra.mxu0 0.0
    %451 = vmatprep.subr.mxu0 0.0
    %452 = vmatpush1.xpose.msra.mxu0 0.0
    %453 = vmatprep.subr.mxu0 0.0
    %454 = vmatpush1.xpose.msra.mxu0 0.0
    %455 = vmatprep.subr.mxu0 0.0
    %456 = vmatpush1.xpose.msra.mxu0 0.0
    %457 = vmatprep.subr.mxu0 0.0
    %458 = vmatpush1.xpose.msra.mxu0 0.0
    %459 = vmatprep.subr.mxu0 0.0
    %460 = vmatpush1.xpose.msra.mxu0 0.0
    %461 = vmatprep.subr.mxu0 0.0
    %462 = vmatpush1.xpose.msra.mxu0 0.0
    %463 = vmatprep.subr.mxu0 0.0
    %464 = vmatpush1.xpose.msra.mxu0 0.0
    %465 = vmatprep.subr.mxu0 0.0
    %466 = vmatpush1.xpose.msra.mxu0 0.0
    %467 = vmatprep.subr.mxu0 0.0
    %468 = vmatpush1.xpose.msra.mxu0 0.0
    %469 = vmatprep.subr.mxu0 0.0
    %470 = vmatpush1.xpose.msra.mxu0 0.0
    %471 = vmatprep.subr.mxu0 0.0
    %472 = vmatpush1.xpose.msra.mxu0 0.0
    %473 = vmatprep.subr.mxu0 0.0
    %474 = vmatpush1.xpose.msra.mxu0 0.0
    %475 = vmatprep.subr.mxu0 0.0
    %476 = vmatpush1.xpose.msra.mxu0 0.0
    %477 = vmatprep.subr.mxu0 0.0
    %478 = vmatpush1.xpose.msra.mxu0 0.0
    %479 = vmatprep.subr.mxu0 0.0
    %480 = vmatpush1.xpose.msra.mxu0 0.0
    %481 = vmatprep.subr.mxu0 0.0
    %482 = vmatpush1.xpose.msra.mxu0 0.0
    %483 = vmatprep.mubr.f32.mxu0 0.0
    %484 = vmatmul.mubr.f32.gmra.mrb[0].mxu0 %v411
    %v485 = vpop.f32.mrb[0].mxu0
    %v486 = vadd.f32 %v205, %v485
    %v487 = vpop.f32.mrb[0].mxu0
    %488 = vdwg.mxu0
    %vm489 = vcmask 123904
    %v490 = vsel %vm489, %v486, -inf
    %491 = vmax.xlane.f32.xlu0 %v490
    %v492 = vpop.xlane.xlu0 %491
    %v493 = vsub.f32 %v486, %v492
    %v494 = vmul.f32 %v493, 1.442695
    %v495 = vpow.pop %v494
    %v496 = vsel %vm489, %v495, 0.0
    %497 = vadd.xlane.f32.xlu0 %v496
    %v498 = vpop.xlane.xlu0 %497
    %v499 = vrcp.pop %v498
    %v500 = vmul.f32 %v495, %v499
    %501 = vrot.lane.b32.xlu0 %v401, 96
    %v502 = vpop.permute.xlu0 %501
    %503 = vrot.lane.b32.xlu0 %v406, 96
    %v504 = vpop.permute.xlu0 %503
    %v508 = vsel %vm409, %v500, 0
    %510 = vmatprep.subr.mxu0 0.0
    %511 = vmatpush1.msra.mxu0 %v502
    %512 = vmatprep.subr.mxu0 0.0
    %513 = vmatpush1.msra.mxu0 %v504
    %514 = vmatprep.subr.mxu0 0.0
    %515 = vmatpush1.msra.mxu0 0.0
    %516 = vmatprep.subr.mxu0 0.0
    %517 = vmatpush1.msra.mxu0 0.0
    %518 = vmatprep.subr.mxu0 0.0
    %519 = vmatpush1.msra.mxu0 0.0
    %520 = vmatprep.subr.mxu0 0.0
    %521 = vmatpush1.msra.mxu0 0.0
    %522 = vmatprep.subr.mxu0 0.0
    %523 = vmatpush1.msra.mxu0 0.0
    %524 = vmatprep.subr.mxu0 0.0
    %525 = vmatpush1.msra.mxu0 0.0
    %526 = vmatprep.subr.mxu0 0.0
    %527 = vmatpush1.msra.mxu0 0.0
    %528 = vmatprep.subr.mxu0 0.0
    %529 = vmatpush1.msra.mxu0 0.0
    %530 = vmatprep.subr.mxu0 0.0
    %531 = vmatpush1.msra.mxu0 0.0
    %532 = vmatprep.subr.mxu0 0.0
    %533 = vmatpush1.msra.mxu0 0.0
    %534 = vmatprep.subr.mxu0 0.0
    %535 = vmatpush1.msra.mxu0 0.0
    %536 = vmatprep.subr.mxu0 0.0
    %537 = vmatpush1.msra.mxu0 0.0
    %538 = vmatprep.subr.mxu0 0.0
    %539 = vmatpush1.msra.mxu0 0.0
    %540 = vmatprep.subr.mxu0 0.0
    %541 = vmatpush1.msra.mxu0 0.0
    %542 = vmatprep.subr.mxu0 0.0
    %543 = vmatpush1.msra.mxu0 0.0
    %544 = vmatprep.subr.mxu0 0.0
    %545 = vmatpush1.msra.mxu0 0.0
    %546 = vmatprep.subr.mxu0 0.0
    %547 = vmatpush1.msra.mxu0 0.0
    %548 = vmatprep.subr.mxu0 0.0
    %549 = vmatpush1.msra.mxu0 0.0
    %550 = vmatprep.subr.mxu0 0.0
    %551 = vmatpush1.msra.mxu0 0.0
    %552 = vmatprep.subr.mxu0 0.0
    %553 = vmatpush1.msra.mxu0 0.0
    %554 = vmatprep.subr.mxu0 0.0
    %555 = vmatpush1.msra.mxu0 0.0
    %556 = vmatprep.subr.mxu0 0.0
    %557 = vmatpush1.msra.mxu0 0.0
    %558 = vmatprep.subr.mxu0 0.0
    %559 = vmatpush1.msra.mxu0 0.0
    %560 = vmatprep.subr.mxu0 0.0
    %561 = vmatpush1.msra.mxu0 0.0
    %562 = vmatprep.subr.mxu0 0.0
    %563 = vmatpush1.msra.mxu0 0.0
    %564 = vmatprep.subr.mxu0 0.0
    %565 = vmatpush1.msra.mxu0 0.0
    %566 = vmatprep.subr.mxu0 0.0
    %567 = vmatpush1.msra.mxu0 0.0
    %568 = vmatprep.subr.mxu0 0.0
    %569 = vmatpush1.msra.mxu0 0.0
    %570 = vmatprep.subr.mxu0 0.0
    %571 = vmatpush1.msra.mxu0 0.0
    %572 = vmatprep.subr.mxu0 0.0
    %573 = vmatpush1.msra.mxu0 0.0
    %574 = vmatprep.mubr.f32.mxu0 0.0
    %575 = vmatmul.mubr.f32.gmra.mrb[0].mxu0 %v508
    %v576 = vpop.f32.mrb[0].mxu0
    %v577 = vadd.f32 0.0, %v576
    %v578 = vpop.f32.mrb[0].mxu0
    %579 = vdwg.mxu0
    %580 = vrot.lane.b32.xlu0 %v305, 112
    %v581 = vpop.permute.xlu0 %580
    %582 = vrot.lane.b32.xlu0 %v401, 112
    %v583 = vpop.permute.xlu0 %582
    %584 = vrot.lane.b32.xlu0 %v406, 112
    %v585 = vpop.permute.xlu0 %584
    %v586 = vsel %vm409, %v581, 0
    %v588 = vsel %vm409, %v583, 0
    %v590 = vsel %vm409, %v585, 0
    %592 = vmatprep.subr.mxu0 0.0
    %593 = vmatpush1.xpose.msra.mxu0 %v588
    %594 = vmatprep.subr.mxu0 0.0
    %595 = vmatpush1.xpose.msra.mxu0 %v590
    %596 = vmatprep.subr.mxu0 0.0
    %597 = vmatpush1.xpose.msra.mxu0 0.0
    %598 = vmatprep.subr.mxu0 0.0
    %599 = vmatpush1.xpose.msra.mxu0 0.0
    %600 = vmatprep.subr.mxu0 0.0
    %601 = vmatpush1.xpose.msra.mxu0 0.0
    %602 = vmatprep.subr.mxu0 0.0
    %603 = vmatpush1.xpose.msra.mxu0 0.0
    %604 = vmatprep.subr.mxu0 0.0
    %605 = vmatpush1.xpose.msra.mxu0 0.0
    %606 = vmatprep.subr.mxu0 0.0
    %607 = vmatpush1.xpose.msra.mxu0 0.0
    %608 = vmatprep.subr.mxu0 0.0
    %609 = vmatpush1.xpose.msra.mxu0 0.0
    %610 = vmatprep.subr.mxu0 0.0
    %611 = vmatpush1.xpose.msra.mxu0 0.0
    %612 = vmatprep.subr.mxu0 0.0
    %613 = vmatpush1.xpose.msra.mxu0 0.0
    %614 = vmatprep.subr.mxu0 0.0
    %615 = vmatpush1.xpose.msra.mxu0 0.0
    %616 = vmatprep.subr.mxu0 0.0
    %617 = vmatpush1.xpose.msra.mxu0 0.0
    %618 = vmatprep.subr.mxu0 0.0
    %619 = vmatpush1.xpose.msra.mxu0 0.0
    %620 = vmatprep.subr.mxu0 0.0
    %621 = vmatpush1.xpose.msra.mxu0 0.0
    %622 = vmatprep.subr.mxu0 0.0
    %623 = vmatpush1.xpose.msra.mxu0 0.0
    %624 = vmatprep.subr.mxu0 0.0
    %625 = vmatpush1.xpose.msra.mxu0 0.0
    %626 = vmatprep.subr.mxu0 0.0
    %627 = vmatpush1.xpose.msra.mxu0 0.0
    %628 = vmatprep.subr.mxu0 0.0
    %629 = vmatpush1.xpose.msra.mxu0 0.0
    %630 = vmatprep.subr.mxu0 0.0
    %631 = vmatpush1.xpose.msra.mxu0 0.0
    %632 = vmatprep.subr.mxu0 0.0
    %633 = vmatpush1.xpose.msra.mxu0 0.0
    %634 = vmatprep.subr.mxu0 0.0
    %635 = vmatpush1.xpose.msra.mxu0 0.0
    %636 = vmatprep.subr.mxu0 0.0
    %637 = vmatpush1.xpose.msra.mxu0 0.0
    %638 = vmatprep.subr.mxu0 0.0
    %639 = vmatpush1.xpose.msra.mxu0 0.0
    %640 = vmatprep.subr.mxu0 0.0
    %641 = vmatpush1.xpose.msra.mxu0 0.0
    %642 = vmatprep.subr.mxu0 0.0
    %643 = vmatpush1.xpose.msra.mxu0 0.0
    %644 = vmatprep.subr.mxu0 0.0
    %645 = vmatpush1.xpose.msra.mxu0 0.0
    %646 = vmatprep.subr.mxu0 0.0
    %647 = vmatpush1.xpose.msra.mxu0 0.0
    %648 = vmatprep.subr.mxu0 0.0
    %649 = vmatpush1.xpose.msra.mxu0 0.0
    %650 = vmatprep.subr.mxu0 0.0
    %651 = vmatpush1.xpose.msra.mxu0 0.0
    %652 = vmatprep.subr.mxu0 0.0
    %653 = vmatpush1.xpose.msra.mxu0 0.0
    %654 = vmatprep.subr.mxu0 0.0
    %655 = vmatpush1.xpose.msra.mxu0 0.0
    %656 = vmatprep.mubr.f32.mxu0 0.0
    %657 = vmatmul.mubr.f32.gmra.mrb[0].mxu0 %v586
    %v658 = vpop.f32.mrb[0].mxu0
    %v659 = vadd.f32 %v205, %v658
    %v660 = vpop.f32.mrb[0].mxu0
    %661 = vdwg.mxu0
    %v662 = vsel %vm489, %v659, -inf
    %663 = vmax.xlane.f32.xlu0 %v662
    %v664 = vpop.xlane.xlu0 %663
    %v665 = vsub.f32 %v659, %v664
    %v666 = vmul.f32 %v665, 1.442695
    %v667 = vpow.pop %v666
    %v668 = vsel %vm489, %v667, 0.0
    %669 = vadd.xlane.f32.xlu0 %v668
    %v670 = vpop.xlane.xlu0 %669
    %v671 = vrcp.pop %v670
    %v672 = vmul.f32 %v667, %v671
    %673 = vrot.lane.b32.xlu0 %v401, 80
    %v674 = vpop.permute.xlu0 %673
    %675 = vrot.lane.b32.xlu0 %v406, 80
    %v676 = vpop.permute.xlu0 %675
    %v680 = vsel %vm409, %v672, 0
    %682 = vmatprep.subr.mxu0 0.0
    %683 = vmatpush1.msra.mxu0 %v674
    %684 = vmatprep.subr.mxu0 0.0
    %685 = vmatpush1.msra.mxu0 %v676
    %686 = vmatprep.subr.mxu0 0.0
    %687 = vmatpush1.msra.mxu0 0.0
    %688 = vmatprep.subr.mxu0 0.0
    %689 = vmatpush1.msra.mxu0 0.0
    %690 = vmatprep.subr.mxu0 0.0
    %691 = vmatpush1.msra.mxu0 0.0
    %692 = vmatprep.subr.mxu0 0.0
    %693 = vmatpush1.msra.mxu0 0.0
    %694 = vmatprep.subr.mxu0 0.0
    %695 = vmatpush1.msra.mxu0 0.0
    %696 = vmatprep.subr.mxu0 0.0
    %697 = vmatpush1.msra.mxu0 0.0
    %698 = vmatprep.subr.mxu0 0.0
    %699 = vmatpush1.msra.mxu0 0.0
    %700 = vmatprep.subr.mxu0 0.0
    %701 = vmatpush1.msra.mxu0 0.0
    %702 = vmatprep.subr.mxu0 0.0
    %703 = vmatpush1.msra.mxu0 0.0
    %704 = vmatprep.subr.mxu0 0.0
    %705 = vmatpush1.msra.mxu0 0.0
    %706 = vmatprep.subr.mxu0 0.0
    %707 = vmatpush1.msra.mxu0 0.0
    %708 = vmatprep.subr.mxu0 0.0
    %709 = vmatpush1.msra.mxu0 0.0
    %710 = vmatprep.subr.mxu0 0.0
    %711 = vmatpush1.msra.mxu0 0.0
    %712 = vmatprep.subr.mxu0 0.0
    %713 = vmatpush1.msra.mxu0 0.0
    %714 = vmatprep.subr.mxu0 0.0
    %715 = vmatpush1.msra.mxu0 0.0
    %716 = vmatprep.subr.mxu0 0.0
    %717 = vmatpush1.msra.mxu0 0.0
    %718 = vmatprep.subr.mxu0 0.0
    %719 = vmatpush1.msra.mxu0 0.0
    %720 = vmatprep.subr.mxu0 0.0
    %721 = vmatpush1.msra.mxu0 0.0
    %722 = vmatprep.subr.mxu0 0.0
    %723 = vmatpush1.msra.mxu0 0.0
    %724 = vmatprep.subr.mxu0 0.0
    %725 = vmatpush1.msra.mxu0 0.0
    %726 = vmatprep.subr.mxu0 0.0
    %727 = vmatpush1.msra.mxu0 0.0
    %728 = vmatprep.subr.mxu0 0.0
    %729 = vmatpush1.msra.mxu0 0.0
    %730 = vmatprep.subr.mxu0 0.0
    %731 = vmatpush1.msra.mxu0 0.0
    %732 = vmatprep.subr.mxu0 0.0
    %733 = vmatpush1.msra.mxu0 0.0
    %734 = vmatprep.subr.mxu0 0.0
    %735 = vmatpush1.msra.mxu0 0.0
    %736 = vmatprep.subr.mxu0 0.0
    %737 = vmatpush1.msra.mxu0 0.0
    %738 = vmatprep.subr.mxu0 0.0
    %739 = vmatpush1.msra.mxu0 0.0
    %740 = vmatprep.subr.mxu0 0.0
    %741 = vmatpush1.msra.mxu0 0.0
    %742 = vmatprep.subr.mxu0 0.0
    %743 = vmatpush1.msra.mxu0 0.0
    %744 = vmatprep.subr.mxu0 0.0
    %745 = vmatpush1.msra.mxu0 0.0
    %746 = vmatprep.mubr.f32.mxu0 0.0
    %747 = vmatmul.mubr.f32.gmra.mrb[0].mxu0 %v680
    %v748 = vpop.f32.mrb[0].mxu0
    %v749 = vadd.f32 0.0, %v748
    %v750 = vpop.f32.mrb[0].mxu0
    %751 = vdwg.mxu0
    %753 = vrot.lane.b32.xlu0 %v749, 16
    %v754 = vpop.permute.xlu0 %753
    %v756 = vsel %vm409, %v577, %v754
    %v757 = vld [vmem:[#allocation2 + $0x20] sm:$0xff]
    %v758 = vld [vmem:[#allocation2 + $0x28] sm:$0xff]
    %v759 = vld [vmem:[#allocation2 + $0x30] sm:$0xff]
    %v760 = vld [vmem:[#allocation2 + $0x38] sm:$0xff]
    %v761 = vld [vmem:[#allocation2 + $0x54] sm:$0x1]
    %v762 = vlaneseq
    %v763 = vshrl.u32 %v762, 7
    %v764 = vsub.s32 0, %v763
    %v765 = vrot.slane %v761, %v764
    %770 = vrot.lane.b32.xlu0 %v757, 96
    %v771 = vpop.permute.xlu0 %770
    %772 = vrot.lane.b32.xlu0 %v758, 96
    %v773 = vpop.permute.xlu0 %772
    %774 = vrot.lane.b32.xlu0 %v759, 96
    %v775 = vpop.permute.xlu0 %774
    %776 = vrot.lane.b32.xlu0 %v760, 96
    %v777 = vpop.permute.xlu0 %776
    %783 = vrot.lane.b32.xlu0 %v765, 64
    %v784 = vpop.permute.xlu0 %783
    %v787 = vsel %vm148, %v756, 0
    %789 = vmatprep.subr.mxu0 0.0
    %790 = vmatpush1.msra.mxu0 %v771
    %791 = vmatprep.subr.mxu0 0.0
    %792 = vmatpush1.msra.mxu0 %v773
    %793 = vmatprep.subr.mxu0 0.0
    %794 = vmatpush1.msra.mxu0 %v775
    %795 = vmatprep.subr.mxu0 0.0
    %796 = vmatpush1.msra.mxu0 %v777
    %797 = vmatprep.subr.mxu0 0.0
    %798 = vmatpush1.msra.mxu0 0.0
    %799 = vmatprep.subr.mxu0 0.0
    %800 = vmatpush1.msra.mxu0 0.0
    %801 = vmatprep.subr.mxu0 0.0
    %802 = vmatpush1.msra.mxu0 0.0
    %803 = vmatprep.subr.mxu0 0.0
    %804 = vmatpush1.msra.mxu0 0.0
    %805 = vmatprep.subr.mxu0 0.0
    %806 = vmatpush1.msra.mxu0 0.0
    %807 = vmatprep.subr.mxu0 0.0
    %808 = vmatpush1.msra.mxu0 0.0
    %809 = vmatprep.subr.mxu0 0.0
    %810 = vmatpush1.msra.mxu0 0.0
    %811 = vmatprep.subr.mxu0 0.0
    %812 = vmatpush1.msra.mxu0 0.0
    %813 = vmatprep.subr.mxu0 0.0
    %814 = vmatpush1.msra.mxu0 0.0
    %815 = vmatprep.subr.mxu0 0.0
    %816 = vmatpush1.msra.mxu0 0.0
    %817 = vmatprep.subr.mxu0 0.0
    %818 = vmatpush1.msra.mxu0 0.0
    %819 = vmatprep.subr.mxu0 0.0
    %820 = vmatpush1.msra.mxu0 0.0
    %821 = vmatprep.subr.mxu0 0.0
    %822 = vmatpush1.msra.mxu0 0.0
    %823 = vmatprep.subr.mxu0 0.0
    %824 = vmatpush1.msra.mxu0 0.0
    %825 = vmatprep.subr.mxu0 0.0
    %826 = vmatpush1.msra.mxu0 0.0
    %827 = vmatprep.subr.mxu0 0.0
    %828 = vmatpush1.msra.mxu0 0.0
    %829 = vmatprep.subr.mxu0 0.0
    %830 = vmatpush1.msra.mxu0 0.0
    %831 = vmatprep.subr.mxu0 0.0
    %832 = vmatpush1.msra.mxu0 0.0
    %833 = vmatprep.subr.mxu0 0.0
    %834 = vmatpush1.msra.mxu0 0.0
    %835 = vmatprep.subr.mxu0 0.0
    %836 = vmatpush1.msra.mxu0 0.0
    %837 = vmatprep.subr.mxu0 0.0
    %838 = vmatpush1.msra.mxu0 0.0
    %839 = vmatprep.subr.mxu0 0.0
    %840 = vmatpush1.msra.mxu0 0.0
    %841 = vmatprep.subr.mxu0 0.0
    %842 = vmatpush1.msra.mxu0 0.0
    %843 = vmatprep.subr.mxu0 0.0
    %844 = vmatpush1.msra.mxu0 0.0
    %845 = vmatprep.subr.mxu0 0.0
    %846 = vmatpush1.msra.mxu0 0.0
    %847 = vmatprep.subr.mxu0 0.0
    %848 = vmatpush1.msra.mxu0 0.0
    %849 = vmatprep.subr.mxu0 0.0
    %850 = vmatpush1.msra.mxu0 0.0
    %851 = vmatprep.subr.mxu0 0.0
    %852 = vmatpush1.msra.mxu0 0.0
    %853 = vmatprep.mubr.f32.mxu0 0.0
    %854 = vmatmul.mubr.f32.gmra.mrb[0].mxu0 %v787
    %v855 = vpop.f32.mrb[0].mxu0
    %v856 = vadd.f32 %v784, %v855
    %v857 = vpop.f32.mrb[0].mxu0
    %858 = vdwg.mxu0
    %v859 = vadd.f32 %v204, %v856
    %v860 = vld [vmem:[#allocation2 + $0x55] sm:$0x1]
    %v861 = vld [vmem:[#allocation2 + $0x56] sm:$0x1]
    %vm862 = vcmask 254976
    %v863 = vsel %vm862, %v859, 0.0
    %864 = vadd.xlane.f32.xlu0 %v863
    %v865 = vpop.xlane.xlu0 %864
    %v866 = vmul.f32 %v865, %v155
    %v867 = vmul.f32 %v859, %v859
    %v868 = vsel %vm862, %v867, 0.0
    %869 = vadd.xlane.f32.xlu0 %v868
    %v870 = vpop.xlane.xlu0 %869
    %v871 = vmul.f32 %v870, %v155
    %v872 = vmul.f32 %v866, %v866
    %v873 = vsub.f32 %v871, %v872
    %v874 = vsub.f32 %v859, %v866
    %v875 = vadd.f32 %v873, 1e-12
    %v876 = vrsqrt.pop %v875
    %v877 = vmul.f32 %v874, %v876
    %v878 = vlaneseq
    %v879 = vshrl.u32 %v878, 7
    %v880 = vsub.s32 0, %v879
    %v881 = vrot.slane %v860, %v880
    %883 = vrot.lane.b32.xlu0 %v881, 64
    %v884 = vpop.permute.xlu0 %883
    %v886 = vmul.f32 %v877, %v884
    %v887 = vlaneseq
    %v888 = vshrl.u32 %v887, 7
    %v889 = vsub.s32 0, %v888
    %v890 = vrot.slane %v861, %v889
    %892 = vrot.lane.b32.xlu0 %v890, 64
    %v893 = vpop.permute.xlu0 %892
    %v895 = vadd.f32 %v886, %v893
    %v896 = vld [vmem:[#allocation2 + $0x57] sm:$0x1]
    %v897 = vlaneseq
    %v898 = vshrl.u32 %v897, 7
    %v899 = vsub.s32 0, %v898
    %v900 = vrot.slane %v896, %v899
    %901 = vrot.lane.b32.xlu0 %v757, 64
    %v902 = vpop.permute.xlu0 %901
    %903 = vrot.lane.b32.xlu0 %v758, 64
    %v904 = vpop.permute.xlu0 %903
    %905 = vrot.lane.b32.xlu0 %v759, 64
    %v906 = vpop.permute.xlu0 %905
    %907 = vrot.lane.b32.xlu0 %v760, 64
    %v908 = vpop.permute.xlu0 %907
    %914 = vrot.lane.b32.xlu0 %v900, 64
    %v915 = vpop.permute.xlu0 %914
    %v918 = vsel %vm148, %v895, 0
    %920 = vmatprep.subr.mxu0 0.0
    %921 = vmatpush1.msra.mxu0 %v902
    %922 = vmatprep.subr.mxu0 0.0
    %923 = vmatpush1.msra.mxu0 %v904
    %924 = vmatprep.subr.mxu0 0.0
    %925 = vmatpush1.msra.mxu0 %v906
    %926 = vmatprep.subr.mxu0 0.0
    %927 = vmatpush1.msra.mxu0 %v908
    %928 = vmatprep.subr.mxu0 0.0
    %929 = vmatpush1.msra.mxu0 0.0
    %930 = vmatprep.subr.mxu0 0.0
    %931 = vmatpush1.msra.mxu0 0.0
    %932 = vmatprep.subr.mxu0 0.0
    %933 = vmatpush1.msra.mxu0 0.0
    %934 = vmatprep.subr.mxu0 0.0
    %935 = vmatpush1.msra.mxu0 0.0
    %936 = vmatprep.subr.mxu0 0.0
    %937 = vmatpush1.msra.mxu0 0.0
    %938 = vmatprep.subr.mxu0 0.0
    %939 = vmatpush1.msra.mxu0 0.0
    %940 = vmatprep.subr.mxu0 0.0
    %941 = vmatpush1.msra.mxu0 0.0
    %942 = vmatprep.subr.mxu0 0.0
    %943 = vmatpush1.msra.mxu0 0.0
    %944 = vmatprep.subr.mxu0 0.0
    %945 = vmatpush1.msra.mxu0 0.0
    %946 = vmatprep.subr.mxu0 0.0
    %947 = vmatpush1.msra.mxu0 0.0
    %948 = vmatprep.subr.mxu0 0.0
    %949 = vmatpush1.msra.mxu0 0.0
    %950 = vmatprep.subr.mxu0 0.0
    %951 = vmatpush1.msra.mxu0 0.0
    %952 = vmatprep.subr.mxu0 0.0
    %953 = vmatpush1.msra.mxu0 0.0
    %954 = vmatprep.subr.mxu0 0.0
    %955 = vmatpush1.msra.mxu0 0.0
    %956 = vmatprep.subr.mxu0 0.0
    %957 = vmatpush1.msra.mxu0 0.0
    %958 = vmatprep.subr.mxu0 0.0
    %959 = vmatpush1.msra.mxu0 0.0
    %960 = vmatprep.subr.mxu0 0.0
    %961 = vmatpush1.msra.mxu0 0.0
    %962 = vmatprep.subr.mxu0 0.0
    %963 = vmatpush1.msra.mxu0 0.0
    %964 = vmatprep.subr.mxu0 0.0
    %965 = vmatpush1.msra.mxu0 0.0
    %966 = vmatprep.subr.mxu0 0.0
    %967 = vmatpush1.msra.mxu0 0.0
    %968 = vmatprep.subr.mxu0 0.0
    %969 = vmatpush1.msra.mxu0 0.0
    %970 = vmatprep.subr.mxu0 0.0
    %971 = vmatpush1.msra.mxu0 0.0
    %972 = vmatprep.subr.mxu0 0.0
    %973 = vmatpush1.msra.mxu0 0.0
    %974 = vmatprep.subr.mxu0 0.0
    %975 = vmatpush1.msra.mxu0 0.0
    %976 = vmatprep.subr.mxu0 0.0
    %977 = vmatpush1.msra.mxu0 0.0
    %978 = vmatprep.subr.mxu0 0.0
    %979 = vmatpush1.msra.mxu0 0.0
    %980 = vmatprep.subr.mxu0 0.0
    %981 = vmatpush1.msra.mxu0 0.0
    %982 = vmatprep.subr.mxu0 0.0
    %983 = vmatpush1.msra.mxu0 0.0
    %984 = vmatprep.mubr.f32.mxu0 0.0
    %985 = vmatmul.mubr.f32.gmra.mrb[0].mxu0 %v918
    %v986 = vpop.f32.mrb[0].mxu0
    %v987 = vadd.f32 %v915, %v986
    %v988 = vpop.f32.mrb[0].mxu0
    %989 = vdwg.mxu0
    %v990 = vmul.f32 %v987, %v987
    %v991 = vmul.f32 %v987, %v990
    %v992 = vmul.f32 %v991, 0.044715
    %v993 = vadd.f32 %v987, %v992
    %v994 = vmul.f32 %v993, 0.7978846
    %v995 = vtanh.pop %v994
    %v996 = vadd.f32 %v995, 1.0
    %v997 = vmul.f32 %v996, 0.5
    %v998 = vmul.f32 %v987, %v997
    %v999 = vld [vmem:[#allocation2 + $0x58] sm:$0x1]
    %v1000 = vlaneseq
    %v1001 = vshrl.u32 %v1000, 7
    %v1002 = vsub.s32 0, %v1001
    %v1003 = vrot.slane %v999, %v1002
    %1012 = vrot.lane.b32.xlu0 %v53, 96
    %v1013 = vpop.permute.xlu0 %1012
    %1014 = vrot.lane.b32.xlu0 %v54, 96
    %v1015 = vpop.permute.xlu0 %1014
    %1016 = vrot.lane.b32.xlu0 %v55, 96
    %v1017 = vpop.permute.xlu0 %1016
    %1018 = vrot.lane.b32.xlu0 %v56, 96
    %v1019 = vpop.permute.xlu0 %1018
    %1020 = vrot.lane.b32.xlu0 %v57, 96
    %v1021 = vpop.permute.xlu0 %1020
    %1022 = vrot.lane.b32.xlu0 %v58, 96
    %v1023 = vpop.permute.xlu0 %1022
    %1024 = vrot.lane.b32.xlu0 %v59, 96
    %v1025 = vpop.permute.xlu0 %1024
    %1026 = vrot.lane.b32.xlu0 %v60, 96
    %v1027 = vpop.permute.xlu0 %1026
    %1037 = vrot.lane.b32.xlu0 %v1003, 64
    %v1038 = vpop.permute.xlu0 %1037
    %vm1040 = vcmask 523264
    %v1042 = vsel %vm1040, %v998, 0
    %1044 = vmatprep.subr.mxu0 0.0
    %1045 = vmatpush1.msra.mxu0 %v1013
    %1046 = vmatprep.subr.mxu0 0.0
    %1047 = vmatpush1.msra.mxu0 %v1015
    %1048 = vmatprep.subr.mxu0 0.0
    %1049 = vmatpush1.msra.mxu0 %v1017
    %1050 = vmatprep.subr.mxu0 0.0
    %1051 = vmatpush1.msra.mxu0 %v1019
    %1052 = vmatprep.subr.mxu0 0.0
    %1053 = vmatpush1.msra.mxu0 %v1021
    %1054 = vmatprep.subr.mxu0 0.0
    %1055 = vmatpush1.msra.mxu0 %v1023
    %1056 = vmatprep.subr.mxu0 0.0
    %1057 = vmatpush1.msra.mxu0 %v1025
    %1058 = vmatprep.subr.mxu0 0.0
    %1059 = vmatpush1.msra.mxu0 %v1027
    %1060 = vmatprep.subr.mxu0 0.0
    %1061 = vmatpush1.msra.mxu0 0.0
    %1062 = vmatprep.subr.mxu0 0.0
    %1063 = vmatpush1.msra.mxu0 0.0
    %1064 = vmatprep.subr.mxu0 0.0
    %1065 = vmatpush1.msra.mxu0 0.0
    %1066 = vmatprep.subr.mxu0 0.0
    %1067 = vmatpush1.msra.mxu0 0.0
    %1068 = vmatprep.subr.mxu0 0.0
    %1069 = vmatpush1.msra.mxu0 0.0
    %1070 = vmatprep.subr.mxu0 0.0
    %1071 = vmatpush1.msra.mxu0 0.0
    %1072 = vmatprep.subr.mxu0 0.0
    %1073 = vmatpush1.msra.mxu0 0.0
    %1074 = vmatprep.subr.mxu0 0.0
    %1075 = vmatpush1.msra.mxu0 0.0
    %1076 = vmatprep.subr.mxu0 0.0
    %1077 = vmatpush1.msra.mxu0 0.0
    %1078 = vmatprep.subr.mxu0 0.0
    %1079 = vmatpush1.msra.mxu0 0.0
    %1080 = vmatprep.subr.mxu0 0.0
    %1081 = vmatpush1.msra.mxu0 0.0
    %1082 = vmatprep.subr.mxu0 0.0
    %1083 = vmatpush1.msra.mxu0 0.0
    %1084 = vmatprep.subr.mxu0 0.0
    %1085 = vmatpush1.msra.mxu0 0.0
    %1086 = vmatprep.subr.mxu0 0.0
    %1087 = vmatpush1.msra.mxu0 0.0
    %1088 = vmatprep.subr.mxu0 0.0
    %1089 = vmatpush1.msra.mxu0 0.0
    %1090 = vmatprep.subr.mxu0 0.0
    %1091 = vmatpush1.msra.mxu0 0.0
    %1092 = vmatprep.subr.mxu0 0.0
    %1093 = vmatpush1.msra.mxu0 0.0
    %1094 = vmatprep.subr.mxu0 0.0
    %1095 = vmatpush1.msra.mxu0 0.0
    %1096 = vmatprep.subr.mxu0 0.0
    %1097 = vmatpush1.msra.mxu0 0.0
    %1098 = vmatprep.subr.mxu0 0.0
    %1099 = vmatpush1.msra.mxu0 0.0
    %1100 = vmatprep.subr.mxu0 0.0
    %1101 = vmatpush1.msra.mxu0 0.0
    %1102 = vmatprep.subr.mxu0 0.0
    %1103 = vmatpush1.msra.mxu0 0.0
    %1104 = vmatprep.subr.mxu0 0.0
    %1105 = vmatpush1.msra.mxu0 0.0
    %1106 = vmatprep.subr.mxu0 0.0
    %1107 = vmatpush1.msra.mxu0 0.0
    %1108 = vmatprep.mubr.f32.mxu0 0.0
    %1109 = vmatmul.mubr.f32.gmra.mrb[0].mxu0 %v1042
    %v1110 = vpop.f32.mrb[0].mxu0
    %v1111 = vadd.f32 %v1038, %v1110
    %v1112 = vpop.f32.mrb[0].mxu0
    %1113 = vdwg.mxu0
    %v1114 = vadd.f32 %v895, %v1111
    %v1115 = vld [vmem:[#allocation2 + $0x59] sm:$0x1]
    %v1116 = vld [vmem:[#allocation2 + $0x5a] sm:$0x1]
    %v1117 = vsel %vm862, %v1114, 0.0
    %1118 = vadd.xlane.f32.xlu0 %v1117
    %v1119 = vpop.xlane.xlu0 %1118
    %v1120 = vmul.f32 %v1119, %v155
    %v1121 = vmul.f32 %v1114, %v1114
    %v1122 = vsel %vm862, %v1121, 0.0
    %1123 = vadd.xlane.f32.xlu0 %v1122
    %v1124 = vpop.xlane.xlu0 %1123
    %v1125 = vmul.f32 %v1124, %v155
    %v1126 = vmul.f32 %v1120, %v1120
    %v1127 = vsub.f32 %v1125, %v1126
    %v1128 = vsub.f32 %v1114, %v1120
    %v1129 = vadd.f32 %v1127, 1e-12
    %v1130 = vrsqrt.pop %v1129
    %v1131 = vmul.f32 %v1128, %v1130
    %v1132 = vlaneseq
    %v1133 = vshrl.u32 %v1132, 7
    %v1134 = vsub.s32 0, %v1133
    %v1135 = vrot.slane %v1115, %v1134
    %1137 = vrot.lane.b32.xlu0 %v1135, 64
    %v1138 = vpop.permute.xlu0 %1137
    %v1140 = vmul.f32 %v1131, %v1138
    %v1141 = vlaneseq
    %v1142 = vshrl.u32 %v1141, 7
    %v1143 = vsub.s32 0, %v1142
    %v1144 = vrot.slane %v1116, %v1143
    %1146 = vrot.lane.b32.xlu0 %v1144, 64
    %v1147 = vpop.permute.xlu0 %1146
    %v1149 = vadd.f32 %v1140, %v1147
    %1150 = vst.msk [vmem:[#allocation5] sm:$0x3] %vm862, %v1149
    // Predicated region
    $region18: #{retriever_forward.1} parent=1 // pred_check
      _
    $region19: #{retriever_forward.1} parent=1 // pred_check_branch
      %1152 = sbr.rel (0) target = $region21
    $region20: #{retriever_forward.1} parent=1 // pred_region
      %s1154 = ssub.s32 32, 32
      %1155 = vsyncadd [#allocation4], %s1154
      %s1157 = sshll.u32 [#allocation5], 4
      %s1158 = int_to_ptr.vmem [resolvable:$true] %s1157
      %1160 = dma.vmem_to_hbm [thread:$0]  %s1158, 32, %s3, [#allocation4]
    $region21: #{retriever_forward.1} parent=1 // pred_fallthru
      _
    // Predicated region
    $region22: #{retriever_forward.1} parent=1 // pred_check
      _
    $region23: #{retriever_forward.1} parent=1 // pred_check_branch
      %1162 = sbr.rel (0) target = $region25
    $region24: #{retriever_forward.1} parent=1 // pred_region
      %1163 = dma.done [#allocation4], 32
    $region25: #{retriever_forward.1} parent=1 // pred_fallthru
      _
    %1164 = vsyncpa [#allocation3], 1
    %1165 = vsyncpa [#allocation4], 1

</llo_original>
